<compile_context>
chip_gen: v7x
topology: tpu7x:2x2x1
jax: 0.10.0
libtpu: 0.0.40
codegen_flags: <defaults>
</compile_context>

<pallas_src>
import jax
import jax.numpy as jnp
from jax.experimental import pallas as pl
from jax.experimental.pallas import tpu as pltpu


def _drop_path_kernel(scale_ref, x_ref, o_ref):
    # scale_ref: VMEM f32 (TB, 1), per-sample scale = floor(keep_prob + U) / keep_prob
    # x_ref / o_ref: (TB, TD) lane-dense tile of the flattened activations.
    # Multiply in f32 (x promotes if narrower), cast the product once on store.
    o_ref[...] = (x_ref[...] * scale_ref[...]).astype(o_ref.dtype)


def _drop_path_add_kernel(scale_ref, r_ref, x_ref, o_ref):
    # Fused residual + DropPath: out = residual + scale * branch (single pass).
    o_ref[...] = (r_ref[...] + x_ref[...] * scale_ref[...]).astype(o_ref.dtype)


def _choose_tiles(B, F, itemsize, target_bytes):
    """Pick a lane-dense (TB, TD) tile for a (B, F) view.

    TD is a multiple of 128 (or full F when F < 128); when more than one column
    tile is needed the count is forced even so a (parallel, parallel) grid
    balances across both v7x TensorCores.  TB is a multiple of the dtype's
    sublane packing unit (8 for f32, 16 for bf16, 32 for int8/fp8) or the full
    batch when B is smaller than that.
    """
    pack = max(8, 32 // itemsize)                      # sublane packing unit
    if F < 128:
        # TODO(synk): F < 128 leaves lane-masked vst.msk stores; padding in HBM
        # would cost more bandwidth than it saves for this streaming kernel.
        TD = F
    else:
        lane_blocks = pl.cdiv(F, 128)
        td_cap = max(128, ((target_bytes // (pack * itemsize)) // 128) * 128)
        n_col = pl.cdiv(F, min((F // 128) * 128, td_cap))
        if n_col > 1 and n_col % 2:
            n_col += 1                                 # even -> megacore balance
        TD = pl.cdiv(lane_blocks, n_col) * 128
    rows = max(1, target_bytes // max(1, TD * itemsize))
    if B < pack:
        TB = B                                         # full (only legal) extent
    else:
        TB = min((B // pack) * pack, max(pack, (rows // pack) * pack))
    return TB, TD


def _per_sample_scale(key, B, keep_prob):
    # Bernoulli(keep_prob) mask scaled by 1/keep_prob, computed in f32 always
    # (bf16 uniforms near 1.0 would bias the keep probability).
    rand = jax.random.uniform(key, (B,), dtype=jnp.float32)
    return (jnp.floor(keep_prob + rand) / keep_prob).reshape(B, 1)


def drop_path(x, key, drop_prob: float = 0.0, training: bool = False,
              donate: bool = False):
    """Pallas TPU implementation of stochastic depth (per-sample drop path)."""
    if drop_prob == 0.0 or not training:
        return x
    keep_prob = 1.0 - drop_prob

    orig_shape = x.shape
    B = orig_shape[0]
    F = 1
    for d in orig_shape[1:]:
        F *= d
    x2 = x.reshape(B, F)
    scale = _per_sample_scale(key, B, keep_prob)

    itemsize = jnp.dtype(x.dtype).itemsize
    TB, TD = _choose_tiles(B, F, itemsize, target_bytes=6 << 20)
    grid = (pl.cdiv(B, TB), pl.cdiv(F, TD))

    out = pl.pallas_call(
        _drop_path_kernel,
        out_shape=jax.ShapeDtypeStruct((B, F), x.dtype),
        grid=grid,
        in_specs=[
            pl.BlockSpec((TB, 1), lambda i, j: (i, 0)),    # per-row scale column
            pl.BlockSpec((TB, TD), lambda i, j: (i, j)),   # activations tile
        ],
        out_specs=pl.BlockSpec((TB, TD), lambda i, j: (i, j)),
        compiler_params=pltpu.CompilerParams(
            dimension_semantics=("parallel", "parallel"),
            vmem_limit_bytes=40 << 20),
        cost_estimate=pl.CostEstimate(
            flops=B * F, transcendentals=0,
            bytes_accessed=2 * B * F * itemsize + 4 * B),
        input_output_aliases=({1: 0} if donate else {}),
    )(scale, x2)
    return out.reshape(orig_shape)


def drop_path_add(residual, x, key, drop_prob: float = 0.0,
                  training: bool = False):
    """Fused `residual + drop_path(x)` — the way DropPath is used in a ViT
    block.  Saves ~40% of the combined HBM traffic vs. running the two ops
    separately (this op is purely bandwidth-bound)."""
    if drop_prob == 0.0 or not training:
        return residual + x
    keep_prob = 1.0 - drop_prob

    orig_shape = x.shape
    B = orig_shape[0]
    F = 1
    for d in orig_shape[1:]:
        F *= d
    x2 = x.reshape(B, F)
    r2 = residual.reshape(B, F)
    scale = _per_sample_scale(key, B, keep_prob)

    itemsize = jnp.dtype(x.dtype).itemsize
    TB, TD = _choose_tiles(B, F, itemsize, target_bytes=4 << 20)  # 4 streams
    grid = (pl.cdiv(B, TB), pl.cdiv(F, TD))

    out = pl.pallas_call(
        _drop_path_add_kernel,
        out_shape=jax.ShapeDtypeStruct((B, F), x.dtype),
        grid=grid,
        in_specs=[
            pl.BlockSpec((TB, 1), lambda i, j: (i, 0)),
            pl.BlockSpec((TB, TD), lambda i, j: (i, j)),   # residual tile
            pl.BlockSpec((TB, TD), lambda i, j: (i, j)),   # branch tile
        ],
        out_specs=pl.BlockSpec((TB, TD), lambda i, j: (i, j)),
        compiler_params=pltpu.CompilerParams(
            dimension_semantics=("parallel", "parallel"),
            vmem_limit_bytes=40 << 20),
        cost_estimate=pl.CostEstimate(
            flops=2 * B * F, transcendentals=0,
            bytes_accessed=3 * B * F * itemsize + 4 * B),
    )(scale, r2, x2)
    return out.reshape(orig_shape)


class DropPath:
    """Mirror of the PyTorch DropPath module (stochastic depth per sample)."""

    def __init__(self, drop_prob=None):
        self.drop_prob = drop_prob
        self.training = True

    def __call__(self, x, key):
        p = 0.0 if self.drop_prob is None else float(self.drop_prob)
        return _drop_path_jit(x, key, drop_prob=p, training=self.training)


# jit-wrapped entry points (drop_prob / training are Python control flow).
_drop_path_jit = jax.jit(drop_path,
                         static_argnames=("drop_prob", "training", "donate"))
_drop_path_add_jit = jax.jit(drop_path_add,
                             static_argnames=("drop_prob", "training"))


if __name__ == "__main__":
    key = jax.random.PRNGKey(0)
    kx, kr, kmask = jax.random.split(key, 3)

    keep_prob = 0.75

    # --- small shape from the module's usage (B, N, D) ---------------------
    B, N, D = 2, 8, 32
    x = jax.random.normal(kx, (B, N, D), dtype=jnp.float32)

    module = DropPath(drop_prob=0.25)
    module.training = True
    out = jax.block_until_ready(module(x, kmask))

    rand = jax.random.uniform(kmask, (B,), dtype=jnp.float32)
    scale = (jnp.floor(keep_prob + rand) / keep_prob).reshape(B, 1, 1)
    ref = x * scale
    assert jnp.allclose(out, ref, atol=1e-6, rtol=1e-5)

    # Eval mode / drop_prob=0 path is identity.
    module.training = False
    out_eval = jax.block_until_ready(module(x, kmask))
    assert jnp.array_equal(out_eval, x)

    # --- ViT-ish shape, f32, exercises the multi-tile balanced grid --------
    B2, N2, D2 = 16, 197, 768
    x2 = jax.random.normal(kx, (B2, N2, D2), dtype=jnp.float32)
    module.training = True
    out2 = jax.block_until_ready(module(x2, kmask))
    rand2 = jax.random.uniform(kmask, (B2,), dtype=jnp.float32)
    scale2 = (jnp.floor(keep_prob + rand2) / keep_prob).reshape(B2, 1, 1)
    ref2 = x2 * scale2
    assert jnp.allclose(out2, ref2, atol=1e-6, rtol=1e-5)

    # --- bf16 path: multiply stays in f32, single cast on store ------------
    x2b = x2.astype(jnp.bfloat16)
    out2b = jax.block_until_ready(module(x2b, kmask))
    ref2b = (x2b.astype(jnp.float32) * scale2).astype(jnp.bfloat16)
    assert jnp.allclose(out2b.astype(jnp.float32), ref2b.astype(jnp.float32),
                        atol=1e-2, rtol=1e-2)

    # --- fused residual + DropPath (preferred call site inside the block) --
    r2 = jax.random.normal(kr, (B2, N2, D2), dtype=jnp.float32)
    out_fused = jax.block_until_ready(
        _drop_path_add_jit(r2, x2, kmask, drop_prob=0.25, training=True))
    ref_fused = r2 + x2 * scale2
    assert jnp.allclose(out_fused, ref_fused, atol=1e-5, rtol=1e-5)

    print("KERNEL_OK")
</pallas_src>

<mosaic_0001>
module attributes {stable_mosaic.version = 11 : i64} {
  func.func @_drop_path_kernel(%arg0: i32, %arg1: i32, %arg2: memref<2x1xf32, #tpu.memory_space<vmem>>, %arg3: memref<2x256xf32, #tpu.memory_space<vmem>>, %arg4: memref<2x256xf32, #tpu.memory_space<vmem>>) attributes {dimension_semantics = [#tpu.dimension_semantics<parallel>, #tpu.dimension_semantics<parallel>], iteration_bounds = array<i64: 1, 1>, scalar_prefetch = 0 : i64, scratch_operands = 0 : i64, tpu.core_type = #tpu.core_type<tc>, window_params = [{transform_indices = @transform_0, window_bounds = array<i64: 2, 1>}, {transform_indices = @transform_1, window_bounds = array<i64: 2, 256>}, {transform_indices = @transform_2, window_bounds = array<i64: 2, 256>}]} {
    %c0 = arith.constant 0 : index
    %c0_0 = arith.constant 0 : index
    %0 = vector.load %arg3[%c0, %c0_0] : memref<2x256xf32, #tpu.memory_space<vmem>>, vector<2x256xf32>
    %c0_1 = arith.constant 0 : index
    %c0_2 = arith.constant 0 : index
    %1 = vector.load %arg2[%c0_1, %c0_2] : memref<2x1xf32, #tpu.memory_space<vmem>>, vector<2x1xf32>
    %2 = vector.broadcast %1 : vector<2x1xf32> to vector<2x256xf32>
    %3 = arith.mulf %0, %2 : vector<2x256xf32>
    %c0_3 = arith.constant 0 : index
    %c0_4 = arith.constant 0 : index
    %4 = vector.load %arg4[%c0_3, %c0_4] : memref<2x256xf32, #tpu.memory_space<vmem>>, vector<2x256xf32>
    tpu.vector_store %arg4[%c0_3, %c0_4], %3 {strides = array<i32>} : memref<2x256xf32, #tpu.memory_space<vmem>>, vector<2x256xf32>,
    return
  }
  func.func @transform_0(%arg0: i32, %arg1: i32) -> (i32, i32) {
    %c0_i32 = arith.constant 0 : i32
    %c0_i32_0 = arith.constant 0 : i32
    return %arg0, %c0_i32 : i32, i32
  }
  func.func @transform_1(%arg0: i32, %arg1: i32) -> (i32, i32) {
    %c0_i32 = arith.constant 0 : i32
    return %arg0, %arg1 : i32, i32
  }
  func.func @transform_2(%arg0: i32, %arg1: i32) -> (i32, i32) {
    %c0_i32 = arith.constant 0 : i32
    return %arg0, %arg1 : i32, i32
  }
}

</mosaic_0001>

<llo_original>
// kernel: drop_path.1
$region0: #{drop_path.1}
  #allocation0 [shape = 'u32[]', space=smem, size = 0x4, offset = 0x4, fixed_abs, tag = 'smem constant byte address 0x4 - core index']
  #allocation1 [shape = 'u32[144,128]{1,0:T(1,128)}', space=vmem, size = 0x12000, scoped, tag = 'internal scratch']
  %s0 = inlined_call_operand.vmem [shape: f32[2,1], index: 0, kind: input, shape index: {}]
  %s1 = inlined_call_operand.vmem [shape: f32[2,256], index: 1, kind: input, shape index: {}]
  %s2 = inlined_call_operand.vmem [shape: f32[2,256], index: 2, kind: output, shape index: {}]
  %s3 = sld [smem:[#allocation0]]
  $region18: #{drop_path.1} parent=0
    _
  %s5 = ssub.s32 1, %s3
  %s6 = scalar_select 0, %s5, %s3
  // Predicated region
  $region2: #{drop_path.1} parent=0 // pred_check
    _
  $region3: #{drop_path.1} parent=0 // pred_check_branch
    %8 = sbr.rel (0) target = $region5
  $region4: #{drop_path.1} parent=0 // pred_region
    _
  $region5: #{drop_path.1} parent=0 // pred_fallthru
    _
  // Predicated region
  $region6: #{drop_path.1} parent=0 // pred_check
    _
  $region7: #{drop_path.1} parent=0 // pred_check_branch
    %10 = sbr.rel (0) target = $region9
  $region8: #{drop_path.1} parent=0 // pred_region
    _
  $region9: #{drop_path.1} parent=0 // pred_fallthru
    _
  %v11 = vld [vmem:[%s1] sm:$0xf]
  %v12 = vld [vmem:[%s0] sm:$0x3]
  %14 = vset.pattern.permute.xlu0 0
  %15 = vperm.xlu0 %14, %v12
  %v16 = vpop.permute.xlu0 %15
  %v18 = vunpack.c.l.s4 269488144
  %v19 = vunpack.c.0.s8 %v18
  %v20 = vlaneseq
  %v21 = vshrl.u32 %v20, 7
  %v22 = vsub.s32 %v19, %v21
  %v23 = vrot.slane %v16, %v22
  %v25 = vmul.f32 %v11, %v23
  %26 = vst [vmem:[%s2] sm:$0xf] %v25
  // Predicated region
  $region10: #{drop_path.1} parent=0 // pred_check
    _
  $region11: #{drop_path.1} parent=0 // pred_check_branch
    %28 = sbr.rel (0) target = $region13
  $region12: #{drop_path.1} parent=0 // pred_region
    _
  $region13: #{drop_path.1} parent=0 // pred_fallthru
    _
  // Predicated region
  $region14: #{drop_path.1} parent=0 // pred_check
    _
  $region15: #{drop_path.1} parent=0 // pred_check_branch
    %30 = sbr.rel (0) target = $region17
  $region16: #{drop_path.1} parent=0 // pred_region
    _
  $region17: #{drop_path.1} parent=0 // pred_fallthru
    _

</llo_original>
